<compile_context>
chip_gen: v6e
topology: v6e:2x2x1
jax: 0.10.0
libtpu: 0.0.40
codegen_flags: <defaults>
</compile_context>

<pallas_src>
import functools

import jax
import jax.numpy as jnp
from jax import lax
from jax.experimental import pallas as pl
from jax.experimental.pallas import tpu as pltpu


def _lstm_kernel(xp_ref, whh_ref, wfc_ref, bfc_ref, out_ref, h_scr, c_scr,
                 *, t_tile, hidden, unroll):
    """One (batch tile, time tile) step of the LSTM recurrence.

    xp_ref  : (t_tile, b_tile, 4H)  pre-computed x @ W_ih + b (gate order i,f,o,g)
    whh_ref : (H, 4H)               recurrent weights (gate order i,f,o,g)
    wfc_ref : (H, 1), bfc_ref: (1, 1)
    out_ref : (b_tile, 1)           written only on the last time step
    h_scr, c_scr : (b_tile, H)      state, persists across the time grid axis
    """
    H = hidden
    ti = pl.program_id(1)

    @pl.when(ti == 0)
    def _init():
        h_scr[...] = jnp.zeros_like(h_scr)
        c_scr[...] = jnp.zeros_like(c_scr)

    whh = whh_ref[...]

    def step(t, carry):
        h, c = carry
        # Serial per-step work: small h @ W_hh matmul + elementwise gates.
        gates = xp_ref[t] + jnp.dot(h, whh, preferred_element_type=jnp.float32)
        # Gate order is [i, f, o, g]: one sigmoid pass over 3H lanes, one tanh
        # pass over H lanes (instead of sigmoid AND tanh over all 4H).
        sig = jax.nn.sigmoid(gates[:, :3 * H])
        g_g = jnp.tanh(gates[:, 3 * H:])
        i_g = sig[:, 0 * H:1 * H]
        f_g = sig[:, 1 * H:2 * H]
        o_g = sig[:, 2 * H:3 * H]
        c_new = f_g * c + i_g * g_g
        h_new = o_g * jnp.tanh(c_new)
        return h_new, c_new

    h_f, c_f = lax.fori_loop(0, t_tile, step, (h_scr[...], c_scr[...]),
                             unroll=unroll)
    # Single state write-back per time tile.
    h_scr[...] = h_f
    c_scr[...] = c_f

    @pl.when(ti == pl.num_programs(1) - 1)
    def _finalize():
        out_ref[...] = (
            jnp.dot(h_f, wfc_ref[...], preferred_element_type=jnp.float32)
            + bfc_ref[...]
        ).astype(out_ref.dtype)


def _choose_t_tile(T, b_tile, H, budget_bytes, cap=256):
    """Largest divisor of T (<= cap) whose VMEM working set fits the budget.

    Working set: double-buffered streamed projection tile + (double-buffered)
    resident weights + h/c state + output tile.
    """
    G = 4 * H
    fixed = (2 * (H * G) + 2 * (H * 1) + 2 * 1      # W_hh, W_fc, b_fc (x2 buf)
             + 2 * b_tile * H                        # h, c scratch
             + 2 * b_tile) * 4                       # out tile (x2 buf)
    best = 1
    for cand in range(1, min(T, cap) + 1):
        if T % cand != 0:
            continue
        proj_bytes = 2 * cand * b_tile * G * 4       # double-buffered x-proj tile
        if fixed + proj_bytes <= budget_bytes:
            best = cand
    return best


def lstm_regressor(x, w_ih, w_hh, b_ih, b_hh, w_fc, b_fc, *,
                   t_tile=None, b_tile=None, unroll=8,
                   vmem_budget_bytes=24 * 1024 * 1024):
    """x: (B, T, I) float32 (batch_first, like PyTorch). Returns (B,) float32."""
    B, T, I = x.shape
    H = w_hh.shape[1]            # w_hh is (4H, H) in PyTorch convention
    G = 4 * H
    x = x.astype(jnp.float32)

    # ---- plain-JAX glue: weight prep -------------------------------------
    def reorder_gates(a):        # PyTorch [i, f, g, o] -> kernel [i, f, o, g]
        return jnp.concatenate([a[:2 * H], a[3 * H:4 * H], a[2 * H:3 * H]],
                               axis=0)

    wih_t = jnp.transpose(reorder_gates(w_ih), (1, 0))   # (I, 4H)
    whh_t = jnp.transpose(reorder_gates(w_hh), (1, 0))   # (H, 4H)
    b_r = reorder_gates(b_ih + b_hh)                     # (4H,)
    wfc_t = jnp.transpose(w_fc, (1, 0))                  # (H, 1)
    bfc = b_fc.reshape(1, 1)                             # (1, 1)

    # Hoisted input projection as one XLA GEMM, emitted time-major (T, B, 4H);
    # the batch<->time transpose is folded into the GEMM output layout, so x
    # is never re-materialized separately in HBM.
    proj = jnp.einsum('bti,ig->tbg', x, wih_t) + b_r[None, None, :]

    # Pad batch to a multiple of 8 sublanes so every per-step tile is aligned.
    B_pad = max(8, ((B + 7) // 8) * 8)
    if B_pad != B:
        proj = jnp.pad(proj, ((0, 0), (0, B_pad - B), (0, 0)))

    if b_tile is None:
        b_tile = B_pad           # split (e.g. B_pad//2) to use both v7x cores
    if B_pad % b_tile != 0 or b_tile % 8 != 0:
        raise ValueError(f"b_tile={b_tile} must be a multiple of 8 dividing "
                         f"padded batch {B_pad}")
    if t_tile is None:
        t_tile = _choose_t_tile(T, b_tile, H, vmem_budget_bytes)
    if T % t_tile != 0:
        raise ValueError(f"t_tile={t_tile} must divide T={T}")

    kernel = functools.partial(_lstm_kernel, t_tile=t_tile, hidden=H,
                               unroll=max(1, min(unroll, t_tile)))

    out = pl.pallas_call(
        kernel,
        out_shape=jax.ShapeDtypeStruct((B_pad, 1), jnp.float32),
        grid_spec=pltpu.PrefetchScalarGridSpec(
            num_scalar_prefetch=0,
            grid=(B_pad // b_tile, T // t_tile),
            in_specs=[
                # Streamed, lane-dense (last dim 4H) projection tiles.
                pl.BlockSpec((t_tile, b_tile, G), lambda bi, ti: (ti, bi, 0)),
                # Resident weights / biases (constant index_map).
                pl.BlockSpec((H, G), lambda bi, ti: (0, 0)),
                pl.BlockSpec((H, 1), lambda bi, ti: (0, 0)),
                pl.BlockSpec((1, 1), lambda bi, ti: (0, 0)),
            ],
            out_specs=pl.BlockSpec((b_tile, 1), lambda bi, ti: (bi, 0)),
            scratch_shapes=[
                pltpu.VMEM((b_tile, H), jnp.float32),   # h state
                pltpu.VMEM((b_tile, H), jnp.float32),   # c state
            ],
        ),
        compiler_params=pltpu.CompilerParams(
            # Batch tiles are independent (megacore-parallel on v7x);
            # the time axis carries the recurrence -> sequential.
            dimension_semantics=("parallel", "arbitrary"),
            vmem_limit_bytes=32 * 1024 * 1024,
        ),
    )(proj, whh_t, wfc_t, bfc)

    return out[:B, 0]            # .squeeze() of (B, 1) -> (B,)


def _lstm_regressor_ref(x, w_ih, w_hh, b_ih, b_hh, w_fc, b_fc):
    """Pure-JAX reference mirroring PyTorch nn.LSTM + Linear."""
    B, T, I = x.shape
    H = w_hh.shape[1]
    h = jnp.zeros((B, H), jnp.float32)
    c = jnp.zeros((B, H), jnp.float32)
    for t in range(T):
        gates = x[:, t, :] @ w_ih.T + h @ w_hh.T + b_ih + b_hh
        i_g = jax.nn.sigmoid(gates[:, 0 * H:1 * H])
        f_g = jax.nn.sigmoid(gates[:, 1 * H:2 * H])
        g_g = jnp.tanh(gates[:, 2 * H:3 * H])
        o_g = jax.nn.sigmoid(gates[:, 3 * H:4 * H])
        c = f_g * c + i_g * g_g
        h = o_g * jnp.tanh(c)
    return (h @ w_fc.T + b_fc)[:, 0]


def _make_params(key, I, H):
    ks = jax.random.split(key, 6)
    scale = 1.0 / jnp.sqrt(H)
    w_ih = jax.random.uniform(ks[0], (4 * H, I), jnp.float32, -scale, scale)
    w_hh = jax.random.uniform(ks[1], (4 * H, H), jnp.float32, -scale, scale)
    b_ih = jax.random.uniform(ks[2], (4 * H,), jnp.float32, -scale, scale)
    b_hh = jax.random.uniform(ks[3], (4 * H,), jnp.float32, -scale, scale)
    w_fc = jax.random.uniform(ks[4], (1, H), jnp.float32, -scale, scale)
    b_fc = jax.random.uniform(ks[5], (1,), jnp.float32, -scale, scale)
    return w_ih, w_hh, b_ih, b_hh, w_fc, b_fc


if __name__ == "__main__":
    key = jax.random.PRNGKey(0)
    k_x, k_p, k_x2 = jax.random.split(key, 3)

    # Small shapes consistent with the module.
    B, T, I, H = 2, 8, 16, 32
    x = jax.random.normal(k_x, (B, T, I), jnp.float32)
    params = _make_params(k_p, I, H)

    ref = _lstm_regressor_ref(x, *params)

    # Multi time-tile path: T tiled into 2 grid steps, state carried in scratch.
    out = lstm_regressor(x, *params, t_tile=4)
    out = jax.block_until_ready(out)
    assert out.shape == (B,), out.shape
    assert jnp.allclose(out, ref, atol=1e-5, rtol=1e-5), (out, ref)

    # Automatic (VMEM-budget) tile chooser.
    out2 = lstm_regressor(x, *params)
    out2 = jax.block_until_ready(out2)
    assert jnp.allclose(out2, ref, atol=1e-5, rtol=1e-5), (out2, ref)

    # Batch-tiled path (exercises the parallel batch grid axis / per-tile
    # state + output indexing used for v7x megacore).
    B2 = 16
    x2 = jax.random.normal(k_x2, (B2, T, I), jnp.float32)
    ref2 = _lstm_regressor_ref(x2, *params)
    out3 = lstm_regressor(x2, *params, b_tile=8, t_tile=4)
    out3 = jax.block_until_ready(out3)
    assert out3.shape == (B2,), out3.shape
    assert jnp.allclose(out3, ref2, atol=1e-5, rtol=1e-5), (out3, ref2)

    print("KERNEL_OK")
</pallas_src>

<mosaic_0001>
module attributes {stable_mosaic.version = 11 : i64} {
  func.func @_lstm_kernel(%arg0: i32, %arg1: i32, %arg2: memref<4x8x128xf32, #tpu.memory_space<vmem>>, %arg3: memref<32x128xf32, #tpu.memory_space<vmem>>, %arg4: memref<32x1xf32, #tpu.memory_space<vmem>>, %arg5: memref<1x1xf32, #tpu.memory_space<vmem>>, %arg6: memref<8x1xf32, #tpu.memory_space<vmem>>, %arg7: memref<8x32xf32, #tpu.memory_space<vmem>>, %arg8: memref<8x32xf32, #tpu.memory_space<vmem>>) attributes {dimension_semantics = [#tpu.dimension_semantics<parallel>, #tpu.dimension_semantics<arbitrary>], iteration_bounds = array<i64: 1, 2>, scalar_prefetch = 0 : i64, scratch_operands = 2 : i64, tpu.core_type = #tpu.core_type<tc>, window_params = [{transform_indices = @transform_0, window_bounds = array<i64: 4, 8, 128>}, {pipeline_mode = #tpu.pipeline_mode<synchronous>, transform_indices = @transform_1, window_bounds = array<i64: 32, 128>}, {pipeline_mode = #tpu.pipeline_mode<synchronous>, transform_indices = @transform_2, window_bounds = array<i64: 32, 1>}, {pipeline_mode = #tpu.pipeline_mode<synchronous>, transform_indices = @transform_3, window_bounds = array<i64: 1, 1>}, {transform_indices = @transform_4, window_bounds = array<i64: 8, 1>}]} {
    %c0_i32 = arith.constant 0 : i32
    %0 = arith.cmpi eq, %arg1, %c0_i32 : i32
    %1 = arith.extui %0 : i1 to i32
    %c0_i32_0 = arith.constant 0 : i32
    %2 = arith.cmpi ne, %1, %c0_i32_0 : i32
    scf.if %2 {
      %cst_28 = arith.constant 0.000000e+00 : f32
      %95 = vector.broadcast %cst_28 : f32 to vector<8x32xf32>
      %c0_29 = arith.constant 0 : index
      %c0_30 = arith.constant 0 : index
      %96 = vector.load %arg7[%c0_29, %c0_30] : memref<8x32xf32, #tpu.memory_space<vmem>>, vector<8x32xf32>
      tpu.vector_store %arg7[%c0_29, %c0_30], %95 {strides = array<i32>} : memref<8x32xf32, #tpu.memory_space<vmem>>, vector<8x32xf32>,
      %cst_31 = arith.constant 0.000000e+00 : f32
      %97 = vector.broadcast %cst_31 : f32 to vector<8x32xf32>
      %c0_32 = arith.constant 0 : index
      %c0_33 = arith.constant 0 : index
      %98 = vector.load %arg8[%c0_32, %c0_33] : memref<8x32xf32, #tpu.memory_space<vmem>>, vector<8x32xf32>
      tpu.vector_store %arg8[%c0_32, %c0_33], %97 {strides = array<i32>} : memref<8x32xf32, #tpu.memory_space<vmem>>, vector<8x32xf32>,
    } else {
    }
    %c0 = arith.constant 0 : index
    %c0_1 = arith.constant 0 : index
    %3 = vector.load %arg3[%c0, %c0_1] : memref<32x128xf32, #tpu.memory_space<vmem>>, vector<32x128xf32>
    %c0_2 = arith.constant 0 : index
    %c0_3 = arith.constant 0 : index
    %4 = vector.load %arg7[%c0_2, %c0_3] : memref<8x32xf32, #tpu.memory_space<vmem>>, vector<8x32xf32>
    %c0_4 = arith.constant 0 : index
    %c0_5 = arith.constant 0 : index
    %5 = vector.load %arg8[%c0_4, %c0_5] : memref<8x32xf32, #tpu.memory_space<vmem>>, vector<8x32xf32>
    %c0_i32_6 = arith.constant 0 : i32
    %6 = arith.index_cast %c0_i32_6 : i32 to index
    %c0_7 = arith.constant 0 : index
    %c0_8 = arith.constant 0 : index
    %7 = vector.load %arg2[%6, %c0_7, %c0_8] : memref<4x8x128xf32, #tpu.memory_space<vmem>>, vector<1x8x128xf32>
    %8 = vector.shape_cast %7 : vector<1x8x128xf32> to vector<8x128xf32>
    %cst = arith.constant dense<0.000000e+00> : vector<8x128xf32>
    %9 = tpu.matmul %4, %3, %cst {dimension_numbers = #tpu.dot_dimension_numbers<[1], [0], [0], [1], [0, 0, 1, 1], [], []>} : vector<8x32xf32>, vector<32x128xf32>, vector<8x128xf32> -> vector<8x128xf32>
    %10 = arith.addf %8, %9 : vector<8x128xf32>
    %11 = vector.extract_strided_slice %10 {offsets = [0, 0], sizes = [8, 96], strides = [1, 1]} : vector<8x128xf32> to vector<8x96xf32>
    %12 = arith.negf %11 : vector<8x96xf32>
    %13 = math.exp %12 : vector<8x96xf32>
    %cst_9 = arith.constant 1.000000e+00 : f32
    %14 = vector.broadcast %cst_9 : f32 to vector<8x96xf32>
    %15 = arith.addf %14, %13 : vector<8x96xf32>
    %16 = arith.divf %14, %15 : vector<8x96xf32>
    %17 = vector.extract_strided_slice %10 {offsets = [0, 96], sizes = [8, 32], strides = [1, 1]} : vector<8x128xf32> to vector<8x32xf32>
    %18 = math.tanh %17 : vector<8x32xf32>
    %19 = vector.extract_strided_slice %16 {offsets = [0, 0], sizes = [8, 32], strides = [1, 1]} : vector<8x96xf32> to vector<8x32xf32>
    %20 = vector.extract_strided_slice %16 {offsets = [0, 32], sizes = [8, 32], strides = [1, 1]} : vector<8x96xf32> to vector<8x32xf32>
    %21 = vector.extract_strided_slice %16 {offsets = [0, 64], sizes = [8, 32], strides = [1, 1]} : vector<8x96xf32> to vector<8x32xf32>
    %22 = arith.mulf %20, %5 : vector<8x32xf32>
    %23 = arith.mulf %19, %18 : vector<8x32xf32>
    %24 = arith.addf %22, %23 : vector<8x32xf32>
    %25 = math.tanh %24 : vector<8x32xf32>
    %26 = arith.mulf %21, %25 : vector<8x32xf32>
    %c1_i32 = arith.constant 1 : i32
    %27 = arith.index_cast %c1_i32 : i32 to index
    %c0_10 = arith.constant 0 : index
    %c0_11 = arith.constant 0 : index
    %28 = vector.load %arg2[%27, %c0_10, %c0_11] : memref<4x8x128xf32, #tpu.memory_space<vmem>>, vector<1x8x128xf32>
    %29 = vector.shape_cast %28 : vector<1x8x128xf32> to vector<8x128xf32>
    %cst_12 = arith.constant dense<0.000000e+00> : vector<8x128xf32>
    %30 = tpu.matmul %26, %3, %cst_12 {dimension_numbers = #tpu.dot_dimension_numbers<[1], [0], [0], [1], [0, 0, 1, 1], [], []>} : vector<8x32xf32>, vector<32x128xf32>, vector<8x128xf32> -> vector<8x128xf32>
    %31 = arith.addf %29, %30 : vector<8x128xf32>
    %32 = vector.extract_strided_slice %31 {offsets = [0, 0], sizes = [8, 96], strides = [1, 1]} : vector<8x128xf32> to vector<8x96xf32>
    %33 = arith.negf %32 : vector<8x96xf32>
    %34 = math.exp %33 : vector<8x96xf32>
    %cst_13 = arith.constant 1.000000e+00 : f32
    %35 = vector.broadcast %cst_13 : f32 to vector<8x96xf32>
    %36 = arith.addf %35, %34 : vector<8x96xf32>
    %37 = arith.divf %35, %36 : vector<8x96xf32>
    %38 = vector.extract_strided_slice %31 {offsets = [0, 96], sizes = [8, 32], strides = [1, 1]} : vector<8x128xf32> to vector<8x32xf32>
    %39 = math.tanh %38 : vector<8x32xf32>
    %40 = vector.extract_strided_slice %37 {offsets = [0, 0], sizes = [8, 32], strides = [1, 1]} : vector<8x96xf32> to vector<8x32xf32>
    %41 = vector.extract_strided_slice %37 {offsets = [0, 32], sizes = [8, 32], strides = [1, 1]} : vector<8x96xf32> to vector<8x32xf32>
    %42 = vector.extract_strided_slice %37 {offsets = [0, 64], sizes = [8, 32], strides = [1, 1]} : vector<8x96xf32> to vector<8x32xf32>
    %43 = arith.mulf %41, %24 : vector<8x32xf32>
    %44 = arith.mulf %40, %39 : vector<8x32xf32>
    %45 = arith.addf %43, %44 : vector<8x32xf32>
    %46 = math.tanh %45 : vector<8x32xf32>
    %47 = arith.mulf %42, %46 : vector<8x32xf32>
    %c2_i32 = arith.constant 2 : i32
    %48 = arith.index_cast %c2_i32 : i32 to index
    %c0_14 = arith.constant 0 : index
    %c0_15 = arith.constant 0 : index
    %49 = vector.load %arg2[%48, %c0_14, %c0_15] : memref<4x8x128xf32, #tpu.memory_space<vmem>>, vector<1x8x128xf32>
    %50 = vector.shape_cast %49 : vector<1x8x128xf32> to vector<8x128xf32>
    %cst_16 = arith.constant dense<0.000000e+00> : vector<8x128xf32>
    %51 = tpu.matmul %47, %3, %cst_16 {dimension_numbers = #tpu.dot_dimension_numbers<[1], [0], [0], [1], [0, 0, 1, 1], [], []>} : vector<8x32xf32>, vector<32x128xf32>, vector<8x128xf32> -> vector<8x128xf32>
    %52 = arith.addf %50, %51 : vector<8x128xf32>
    %53 = vector.extract_strided_slice %52 {offsets = [0, 0], sizes = [8, 96], strides = [1, 1]} : vector<8x128xf32> to vector<8x96xf32>
    %54 = arith.negf %53 : vector<8x96xf32>
    %55 = math.exp %54 : vector<8x96xf32>
    %cst_17 = arith.constant 1.000000e+00 : f32
    %56 = vector.broadcast %cst_17 : f32 to vector<8x96xf32>
    %57 = arith.addf %56, %55 : vector<8x96xf32>
    %58 = arith.divf %56, %57 : vector<8x96xf32>
    %59 = vector.extract_strided_slice %52 {offsets = [0, 96], sizes = [8, 32], strides = [1, 1]} : vector<8x128xf32> to vector<8x32xf32>
    %60 = math.tanh %59 : vector<8x32xf32>
    %61 = vector.extract_strided_slice %58 {offsets = [0, 0], sizes = [8, 32], strides = [1, 1]} : vector<8x96xf32> to vector<8x32xf32>
    %62 = vector.extract_strided_slice %58 {offsets = [0, 32], sizes = [8, 32], strides = [1, 1]} : vector<8x96xf32> to vector<8x32xf32>
    %63 = vector.extract_strided_slice %58 {offsets = [0, 64], sizes = [8, 32], strides = [1, 1]} : vector<8x96xf32> to vector<8x32xf32>
    %64 = arith.mulf %62, %45 : vector<8x32xf32>
    %65 = arith.mulf %61, %60 : vector<8x32xf32>
    %66 = arith.addf %64, %65 : vector<8x32xf32>
    %67 = math.tanh %66 : vector<8x32xf32>
    %68 = arith.mulf %63, %67 : vector<8x32xf32>
    %c3_i32 = arith.constant 3 : i32
    %69 = arith.index_cast %c3_i32 : i32 to index
    %c0_18 = arith.constant 0 : index
    %c0_19 = arith.constant 0 : index
    %70 = vector.load %arg2[%69, %c0_18, %c0_19] : memref<4x8x128xf32, #tpu.memory_space<vmem>>, vector<1x8x128xf32>
    %71 = vector.shape_cast %70 : vector<1x8x128xf32> to vector<8x128xf32>
    %cst_20 = arith.constant dense<0.000000e+00> : vector<8x128xf32>
    %72 = tpu.matmul %68, %3, %cst_20 {dimension_numbers = #tpu.dot_dimension_numbers<[1], [0], [0], [1], [0, 0, 1, 1], [], []>} : vector<8x32xf32>, vector<32x128xf32>, vector<8x128xf32> -> vector<8x128xf32>
    %73 = arith.addf %71, %72 : vector<8x128xf32>
    %74 = vector.extract_strided_slice %73 {offsets = [0, 0], sizes = [8, 96], strides = [1, 1]} : vector<8x128xf32> to vector<8x96xf32>
    %75 = arith.negf %74 : vector<8x96xf32>
    %76 = math.exp %75 : vector<8x96xf32>
    %cst_21 = arith.constant 1.000000e+00 : f32
    %77 = vector.broadcast %cst_21 : f32 to vector<8x96xf32>
    %78 = arith.addf %77, %76 : vector<8x96xf32>
    %79 = arith.divf %77, %78 : vector<8x96xf32>
    %80 = vector.extract_strided_slice %73 {offsets = [0, 96], sizes = [8, 32], strides = [1, 1]} : vector<8x128xf32> to vector<8x32xf32>
    %81 = math.tanh %80 : vector<8x32xf32>
    %82 = vector.extract_strided_slice %79 {offsets = [0, 0], sizes = [8, 32], strides = [1, 1]} : vector<8x96xf32> to vector<8x32xf32>
    %83 = vector.extract_strided_slice %79 {offsets = [0, 32], sizes = [8, 32], strides = [1, 1]} : vector<8x96xf32> to vector<8x32xf32>
    %84 = vector.extract_strided_slice %79 {offsets = [0, 64], sizes = [8, 32], strides = [1, 1]} : vector<8x96xf32> to vector<8x32xf32>
    %85 = arith.mulf %83, %66 : vector<8x32xf32>
    %86 = arith.mulf %82, %81 : vector<8x32xf32>
    %87 = arith.addf %85, %86 : vector<8x32xf32>
    %88 = math.tanh %87 : vector<8x32xf32>
    %89 = arith.mulf %84, %88 : vector<8x32xf32>
    %c4_i32 = arith.constant 4 : i32
    %c0_22 = arith.constant 0 : index
    %c0_23 = arith.constant 0 : index
    %90 = vector.load %arg7[%c0_22, %c0_23] : memref<8x32xf32, #tpu.memory_space<vmem>>, vector<8x32xf32>
    tpu.vector_store %arg7[%c0_22, %c0_23], %89 {strides = array<i32>} : memref<8x32xf32, #tpu.memory_space<vmem>>, vector<8x32xf32>,
    %c0_24 = arith.constant 0 : index
    %c0_25 = arith.constant 0 : index
    %91 = vector.load %arg8[%c0_24, %c0_25] : memref<8x32xf32, #tpu.memory_space<vmem>>, vector<8x32xf32>
    tpu.vector_store %arg8[%c0_24, %c0_25], %87 {strides = array<i32>} : memref<8x32xf32, #tpu.memory_space<vmem>>, vector<8x32xf32>,
    %c1_i32_26 = arith.constant 1 : i32
    %92 = arith.cmpi eq, %arg1, %c1_i32_26 : i32
    %93 = arith.extui %92 : i1 to i32
    %c0_i32_27 = arith.constant 0 : i32
    %94 = arith.cmpi ne, %93, %c0_i32_27 : i32
    scf.if %94 {
      %c0_28 = arith.constant 0 : index
      %c0_29 = arith.constant 0 : index
      %95 = vector.load %arg4[%c0_28, %c0_29] : memref<32x1xf32, #tpu.memory_space<vmem>>, vector<32x1xf32>
      %cst_30 = arith.constant dense<0.000000e+00> : vector<8x1xf32>
      %96 = tpu.matmul %89, %95, %cst_30 {dimension_numbers = #tpu.dot_dimension_numbers<[1], [0], [0], [1], [0, 0, 1, 1], [], []>} : vector<8x32xf32>, vector<32x1xf32>, vector<8x1xf32> -> vector<8x1xf32>
      %c0_31 = arith.constant 0 : index
      %c0_32 = arith.constant 0 : index
      %97 = vector.load %arg5[%c0_31, %c0_32] : memref<1x1xf32, #tpu.memory_space<vmem>>, vector<1x1xf32>
      %98 = vector.broadcast %97 : vector<1x1xf32> to vector<8x1xf32>
      %99 = arith.addf %96, %98 : vector<8x1xf32>
      %c0_33 = arith.constant 0 : index
      %c0_34 = arith.constant 0 : index
      %100 = vector.load %arg6[%c0_33, %c0_34] : memref<8x1xf32, #tpu.memory_space<vmem>>, vector<8x1xf32>
      tpu.vector_store %arg6[%c0_33, %c0_34], %99 {strides = array<i32>} : memref<8x1xf32, #tpu.memory_space<vmem>>, vector<8x1xf32>,
    } else {
    }
    return
  }
  func.func @transform_0(%arg0: i32, %arg1: i32) -> (i32, i32, i32) {
    %c0_i32 = arith.constant 0 : i32
    %c0_i32_0 = arith.constant 0 : i32
    return %arg1, %arg0, %c0_i32 : i32, i32, i32
  }
  func.func @transform_1(%arg0: i32, %arg1: i32) -> (i32, i32) {
    %c0_i32 = arith.constant 0 : i32
    %c0_i32_0 = arith.constant 0 : i32
    %c0_i32_1 = arith.constant 0 : i32
    return %c0_i32, %c0_i32_0 : i32, i32
  }
  func.func @transform_2(%arg0: i32, %arg1: i32) -> (i32, i32) {
    %c0_i32 = arith.constant 0 : i32
    %c0_i32_0 = arith.constant 0 : i32
    %c0_i32_1 = arith.constant 0 : i32
    return %c0_i32, %c0_i32_0 : i32, i32
  }
  func.func @transform_3(%arg0: i32, %arg1: i32) -> (i32, i32) {
    %c0_i32 = arith.constant 0 : i32
    %c0_i32_0 = arith.constant 0 : i32
    %c0_i32_1 = arith.constant 0 : i32
    return %c0_i32, %c0_i32_0 : i32, i32
  }
  func.func @transform_4(%arg0: i32, %arg1: i32) -> (i32, i32) {
    %c0_i32 = arith.constant 0 : i32
    %c0_i32_0 = arith.constant 0 : i32
    return %arg0, %c0_i32 : i32, i32
  }
}

</mosaic_0001>

<llo_original>
// kernel: tpu_custom_call.1
$region0: #{tpu_custom_call.1}
  #allocation0 [shape = 'u32[]', space=smem, size = 0x4, offset = 0x4, fixed_abs, tag = 'smem constant byte address 0x4 - core index']
  #allocation1 [shape = 'u32[144,128]{1,0:T(1,128)}', space=vmem, size = 0x12000, scoped, tag = 'internal scratch']
  #allocation2 [shape = 'f32[8,32]{1,0:T(8,128)}', space=vmem, size = 0x1000, scoped, tag = 'scratch operand']
  #allocation3 [shape = 'f32[8,32]{1,0:T(8,128)}', space=vmem, size = 0x1000, scoped, tag = 'scratch operand']
  #allocation4 [shape = 'f32[1,1]{1,0:T(1,128)S(1)}', space=vmem, size = 0x200, scoped, tag = 'scoped memory for tpu_custom_call.1']
  %s0 = inlined_call_operand.hbm [shape: f32[8,8,128], index: 0, kind: input, shape index: {}]
  %s1 = inlined_call_operand.vmem [shape: f32[32,128], index: 1, kind: input, shape index: {}]
  %s2 = inlined_call_operand.vmem [shape: f32[32,1], index: 2, kind: input, shape index: {}]
  %s3 = inlined_call_operand.<no memory space> [shape: f32[1,1], index: 3, kind: input, shape index: {}]
  %s4 = inlined_call_operand.vmem [shape: f32[8,1], index: 4, kind: output, shape index: {}]
  %s5 = sld [smem:[#allocation0]]
  $region61: #{tpu_custom_call.1} parent=0
    _
  %s7 = ssub.s32 1, %s5
  %s8 = scalar_select 0, %s7, %s5
  %v9 = vstv %s3
  %10 = vst [vmem:[#allocation4] sm:$0x1] %v9
  $region1: #{tpu_custom_call.1} parent=0
    #allocation5 [shape = 'u8[32768]{0}', space=vmem, size = 0x8000, scoped, tag = 'input window, operand 0']
    #allocation6 [shape = 's32[2]{0}', space=sflag, size = 0x8, scoped, tag = 'scoped memory for tpu_custom_call.1']
    %11 = vsyncpa [#allocation6], 0
    %s12 = scalar_lea.sflag [#allocation6], 1
    %13 = vsyncpa %s12, 0
    loop: start=0, step=1, limit=4
    $region2: #{tpu_custom_call.1} parent=1 // loop_pre_header
      _
    $region3: #{tpu_custom_call.1} parent=1 // loop_header
      %s15 = sphi 0, %s19
      %p16 = scmp.ge.s32.totalorder %s15, 4
      %s22 = sphi 0, %s34
      %s23 = sphi 0, %s30
      %s24 = sphi 0, %s22
      %s25 = sphi 0, %s23
      %s26 = sphi 0, %s24
      %s27 = sphi 0, %s25
      %s39 = sphi 0, %s41
      %s42 = sphi 0, %s39
      %s43 = sphi 0, %s42
      %s59 = sphi 0, %s43
      %s63 = sphi 0, %s63
      %s65 = sphi 0, %s63
      %s66 = sphi 0, %s65
      %s80 = sphi 0, %s66
      %s84 = sphi 0, %s84
      %s86 = sphi 0, %s84
      %s87 = sphi 0, %s86
      %s101 = sphi 0, %s87
      %s105 = sphi 0, %s105
      %s107 = sphi 0, %s105
      %s108 = sphi 0, %s107
      %s122 = sphi 0, %s108
      %s128 = sphi 0, %s130
      %s131 = sphi 0, %s128
      %s132 = sphi 0, %s131
      %s148 = sphi 0, %s132
    $region4: #{tpu_custom_call.1} parent=1 // loop_header_branch
      %18 = sbr.rel (%p16) target = $region8
    $region5: #{tpu_custom_call.1} parent=1 // loop_body
      %s20 = ssub.s32 %s15, 1
      %s21 = ssub.s32 %s15, 2
      %s28 = sadd.s32 1, %s23
      %p29 = scmp.ge.s32.totalorder %s28, 2
      %s30 = scalar_select %p29, 0, %s28
      %s31 = sadd.s32 1, %s22
      %s32 = scalar_select %p29, %s31, %s22
      %p33 = scmp.ge.s32.totalorder %s32, 1
      %s34 = scalar_select %p33, 0, %s32
      %s35 = ssub.s32 %s23, %s30
      %s36 = ssub.s32 %s22, %s34
      %s37 = sor.u32 %s35, %s36
      %p38 = scmp.eq.s32.totalorder %s37, 0
      %s40 = sadd.s32 %s39, 1
      %s41 = scalar_select %p38, %s39, %s40
      %p44 = pneg %p38
      %p45 = scmp.eq.s32.totalorder %s15, 1
      %p46 = por %p44, %p45
      %p47 = scmp.ne.s32.totalorder %s39, %s42
      %p48 = scmp.eq.s32.totalorder %s15, 0
      %p49 = por %p47, %p48
      %p50 = scmp.ne.s32.totalorder %s39, %s42
      %p51 = scmp.eq.s32.totalorder %s20, 1
      %p52 = por %p50, %p51
      %p53 = scmp.ne.s32.totalorder %s42, %s43
      %p54 = scmp.eq.s32.totalorder %s20, 0
      %p55 = por %p53, %p54
      %p56 = scmp.ne.s32.totalorder %s42, %s43
      %p57 = scmp.eq.s32.totalorder %s21, 1
      %p58 = por %p56, %p57
      %p60 = scmp.ne.s32.totalorder %s43, %s59
      %p61 = scmp.eq.s32.totalorder %s21, 0
      %p62 = por %p60, %p61
      %s64 = sadd.s32 %s63, 1
      %p67 = scmp.eq.s32.totalorder %s15, 1
      %p68 = scmp.ne.s32.totalorder %s63, %s65
      %p69 = scmp.eq.s32.totalorder %s15, 0
      %p70 = por %p68, %p69
      %p71 = scmp.ne.s32.totalorder %s63, %s65
      %p72 = scmp.eq.s32.totalorder %s20, 1
      %p73 = por %p71, %p72
      %p74 = scmp.ne.s32.totalorder %s65, %s66
      %p75 = scmp.eq.s32.totalorder %s20, 0
      %p76 = por %p74, %p75
      %p77 = scmp.ne.s32.totalorder %s65, %s66
      %p78 = scmp.eq.s32.totalorder %s21, 1
      %p79 = por %p77, %p78
      %p81 = scmp.ne.s32.totalorder %s66, %s80
      %p82 = scmp.eq.s32.totalorder %s21, 0
      %p83 = por %p81, %p82
      %s85 = sadd.s32 %s84, 1
      %p88 = scmp.eq.s32.totalorder %s15, 1
      %p89 = scmp.ne.s32.totalorder %s84, %s86
      %p90 = scmp.eq.s32.totalorder %s15, 0
      %p91 = por %p89, %p90
      %p92 = scmp.ne.s32.totalorder %s84, %s86
      %p93 = scmp.eq.s32.totalorder %s20, 1
      %p94 = por %p92, %p93
      %p95 = scmp.ne.s32.totalorder %s86, %s87
      %p96 = scmp.eq.s32.totalorder %s20, 0
      %p97 = por %p95, %p96
      %p98 = scmp.ne.s32.totalorder %s86, %s87
      %p99 = scmp.eq.s32.totalorder %s21, 1
      %p100 = por %p98, %p99
      %p102 = scmp.ne.s32.totalorder %s87, %s101
      %p103 = scmp.eq.s32.totalorder %s21, 0
      %p104 = por %p102, %p103
      %s106 = sadd.s32 %s105, 1
      %p109 = scmp.eq.s32.totalorder %s15, 1
      %p110 = scmp.ne.s32.totalorder %s105, %s107
      %p111 = scmp.eq.s32.totalorder %s15, 0
      %p112 = por %p110, %p111
      %p113 = scmp.ne.s32.totalorder %s105, %s107
      %p114 = scmp.eq.s32.totalorder %s20, 1
      %p115 = por %p113, %p114
      %p116 = scmp.ne.s32.totalorder %s107, %s108
      %p117 = scmp.eq.s32.totalorder %s20, 0
      %p118 = por %p116, %p117
      %p119 = scmp.ne.s32.totalorder %s107, %s108
      %p120 = scmp.eq.s32.totalorder %s21, 1
      %p121 = por %p119, %p120
      %p123 = scmp.ne.s32.totalorder %s108, %s122
      %p124 = scmp.eq.s32.totalorder %s21, 0
      %p125 = por %p123, %p124
      %s126 = ssub.s32 %s22, %s34
      %p127 = scmp.eq.s32.totalorder %s126, 0
      %s129 = sadd.s32 %s128, 1
      %s130 = scalar_select %p127, %s128, %s129
      %p133 = pneg %p127
      %p134 = scmp.eq.s32.totalorder %s15, 1
      %p135 = por %p133, %p134
      %p136 = scmp.ne.s32.totalorder %s128, %s131
      %p137 = scmp.eq.s32.totalorder %s15, 0
      %p138 = por %p136, %p137
      %p139 = scmp.ne.s32.totalorder %s128, %s131
      %p140 = scmp.eq.s32.totalorder %s20, 1
      %p141 = por %p139, %p140
      %p142 = scmp.ne.s32.totalorder %s131, %s132
      %p143 = scmp.eq.s32.totalorder %s20, 0
      %p144 = por %p142, %p143
      %p145 = scmp.ne.s32.totalorder %s131, %s132
      %p146 = scmp.eq.s32.totalorder %s21, 1
      %p147 = por %p145, %p146
      %p149 = scmp.ne.s32.totalorder %s132, %s148
      %p150 = scmp.eq.s32.totalorder %s21, 0
      %p151 = por %p149, %p150
      %p152 = scmp.le.s32.totalorder 1, %s15
      %p153 = scmp.lt.s32.totalorder %s15, 3
      %p154 = pnand %p152, %p153
      %p155 = pneg %p154
      // Predicated region
      $region9: #{tpu_custom_call.1} parent=5 // pred_check
        _
      $region10: #{tpu_custom_call.1} parent=5 // pred_check_branch
        %157 = sbr.rel (%p154) target = $region12
      $region11: #{tpu_custom_call.1} parent=5 // pred_region
        %s158 = ssub.s32 %s15, 1
        // Predicated region
        $region13: #{tpu_custom_call.1} parent=11 // pred_check
          %p159 = pneg %p76
        $region14: #{tpu_custom_call.1} parent=11 // pred_check_branch
          %161 = sbr.rel (%p159) target = $region16
        $region15: #{tpu_custom_call.1} parent=11 // pred_region
          _
        $region16: #{tpu_custom_call.1} parent=11 // pred_fallthru
          _
        // Predicated region
        $region17: #{tpu_custom_call.1} parent=11 // pred_check
          %p162 = pneg %p97
        $region18: #{tpu_custom_call.1} parent=11 // pred_check_branch
          %164 = sbr.rel (%p162) target = $region20
        $region19: #{tpu_custom_call.1} parent=11 // pred_region
          _
        $region20: #{tpu_custom_call.1} parent=11 // pred_fallthru
          _
        // Predicated region
        $region21: #{tpu_custom_call.1} parent=11 // pred_check
          %p165 = pneg %p118
        $region22: #{tpu_custom_call.1} parent=11 // pred_check_branch
          %167 = sbr.rel (%p165) target = $region24
        $region23: #{tpu_custom_call.1} parent=11 // pred_region
          _
        $region24: #{tpu_custom_call.1} parent=11 // pred_fallthru
          _
      $region12: #{tpu_custom_call.1} parent=5 // pred_fallthru
        _
      %p168 = scmp.lt.s32.totalorder %s15, 2
      // Predicated region
      $region25: #{tpu_custom_call.1} parent=5 // pred_check
        %p169 = pneg %p168
      $region26: #{tpu_custom_call.1} parent=5 // pred_check_branch
        %171 = sbr.rel (%p169) target = $region28
      $region27: #{tpu_custom_call.1} parent=5 // pred_region
        // Predicated region
        $region29: #{tpu_custom_call.1} parent=27 // pred_check
          %p172 = pneg %p49
        $region30: #{tpu_custom_call.1} parent=27 // pred_check_branch
          %174 = sbr.rel (%p172) target = $region32
        $region31: #{tpu_custom_call.1} parent=27 // pred_region
          %s175 = sand.u32 %s39, 1
          %s176 = scalar_lea.sflag [#allocation6], %s175
          %s177 = sand.u32 %s39, 1
          %s178 = smul.addr %s177, 32
          %s179 = scalar_lea.vmem [#allocation5], %s178
          %s180 = smul.u32 4, %s23
          %s182 = ssub.s32 512, 512
          %183 = vsyncadd %s176, %s182
          %s184 = sadd.s32 %s22, %s180
          %s185 = smul.addr %s184, 128
          %s186 = scalar_lea.hbm %s0, %s185
          %s187 = sshll.u32 %s179, 4
          %s188 = int_to_ptr.vmem [resolvable:$true] %s187
          %193 = dma.hbm_to_vmem [thread:$0]  %s186, 512, %s188, %s176, 128, 128, 8
        $region32: #{tpu_custom_call.1} parent=27 // pred_fallthru
          _
      $region28: #{tpu_custom_call.1} parent=5 // pred_fallthru
        _
      %p194 = scmp.le.s32.totalorder 1, %s15
      %p195 = scmp.lt.s32.totalorder %s15, 3
      %p196 = pnand %p194, %p195
      %p197 = pneg %p196
      // Predicated region
      $region33: #{tpu_custom_call.1} parent=5 // pred_check
        _
      $region34: #{tpu_custom_call.1} parent=5 // pred_check_branch
        %199 = sbr.rel (%p196) target = $region36
      $region35: #{tpu_custom_call.1} parent=5 // pred_region
        %s200 = ssub.s32 %s15, 1
        %s201 = sand.u32 %s42, 1
        %s202 = scalar_lea.sflag [#allocation6], %s201
        %s203 = sand.u32 %s42, 1
        %s204 = smul.addr %s203, 32
        %s205 = scalar_lea.vmem [#allocation5], %s204
        // Predicated region
        $region37: #{tpu_custom_call.1} parent=35 // pred_check
          %p206 = pneg %p55
        $region38: #{tpu_custom_call.1} parent=35 // pred_check_branch
          %208 = sbr.rel (%p206) target = $region40
        $region39: #{tpu_custom_call.1} parent=35 // pred_region
          %209 = dma.done %s202, 512
        $region40: #{tpu_custom_call.1} parent=35 // pred_fallthru
          _
        %s210 = sand.u32 %s42, 1
        %s211 = scalar_lea.sflag [#allocation6], %s210
        %s212 = sand.u32 %s42, 1
        %s213 = smul.addr %s212, 32
        %s214 = scalar_lea.vmem [#allocation5], %s213
        %p215 = pneg %p55
        %p216 = pneg %p52
        %p217 = pneg %p76
        %p218 = pneg %p73
        %p219 = pneg %p97
        %p220 = pneg %p94
        %p221 = pneg %p118
        %p222 = pneg %p115
        %p223 = pneg %p144
        %p224 = pneg %p141
        %p225 = scmp.lt.s32.totalorder %s24, 0
        %s226 = scalar_select %p225, %s24, 0
        %s227 = smul.addr %s226, 8
        %s228 = scalar_lea.vmem %s4, %s227
        %s229 = smul.u32 4, %s25
        %p230 = scmp.lt.s32.totalorder %s24, 0
        %s231 = scalar_select %p230, %s24, 0
        %s232 = smul.addr %s231, 8
        %s233 = scalar_lea.vmem %s4, %s232
        %p234 = scmp.eq.s32.totalorder %s25, 0
        // Predicated region
        $region41: #{tpu_custom_call.1} parent=35 // pred_check
          %p235 = pneg %p234
        $region42: #{tpu_custom_call.1} parent=35 // pred_check_branch
          %237 = sbr.rel (%p235) target = $region44
        $region43: #{tpu_custom_call.1} parent=35 // pred_region
          %vm238 = vcmask 261120
          %239 = vst.msk [vmem:[#allocation2] sm:$0xff] %vm238, 0.0
          %240 = vst.msk [vmem:[#allocation3] sm:$0xff] %vm238, 0.0
        $region44: #{tpu_custom_call.1} parent=35 // pred_fallthru
          _
        %v241 = vld [vmem:[%s1] sm:$0xff]
        %v242 = vld [vmem:[%s1 + $0x8] sm:$0xff]
        %v243 = vld [vmem:[%s1 + $0x10] sm:$0xff]
        %v244 = vld [vmem:[%s1 + $0x18] sm:$0xff]
        %v245 = vld [vmem:[#allocation2] sm:$0xff]
        %v246 = vld [vmem:[#allocation3] sm:$0xff]
        %v247 = vld [vmem:[%s205] sm:$0xff]
        %vm248 = vcmask 261120
        %v250 = vsel %vm248, %v245, 0
        %252 = vmatprep.subr.mxu0 0.0
        %253 = vmatpush1.msra.mxu0 0.0
        %254 = vmatprep.subr.mxu0 0.0
        %255 = vmatpush1.msra.mxu0 0.0
        %256 = vmatprep.subr.mxu0 0.0
        %257 = vmatpush1.msra.mxu0 0.0
        %258 = vmatprep.subr.mxu0 0.0
        %259 = vmatpush1.msra.mxu0 0.0
        %260 = vmatprep.subr.mxu0 0.0
        %261 = vmatpush1.msra.mxu0 0.0
        %262 = vmatprep.subr.mxu0 0.0
        %263 = vmatpush1.msra.mxu0 0.0
        %264 = vmatprep.subr.mxu0 0.0
        %265 = vmatpush1.msra.mxu0 0.0
        %266 = vmatprep.subr.mxu0 0.0
        %267 = vmatpush1.msra.mxu0 0.0
        %268 = vmatprep.subr.mxu0 0.0
        %269 = vmatpush1.msra.mxu0 0.0
        %270 = vmatprep.subr.mxu0 0.0
        %271 = vmatpush1.msra.mxu0 0.0
        %272 = vmatprep.subr.mxu0 0.0
        %273 = vmatpush1.msra.mxu0 0.0
        %274 = vmatprep.subr.mxu0 0.0
        %275 = vmatpush1.msra.mxu0 0.0
        %276 = vmatprep.subr.mxu0 0.0
        %277 = vmatpush1.msra.mxu0 %v244
        %278 = vmatprep.subr.mxu0 0.0
        %279 = vmatpush1.msra.mxu0 %v243
        %280 = vmatprep.subr.mxu0 0.0
        %281 = vmatpush1.msra.mxu0 %v242
        %282 = vmatprep.subr.mxu0 0.0
        %283 = vmatpush1.msra.mxu0 %v241
        %284 = vmatprep.subr.mxu0 0.0
        %285 = vmatpush2.msra.mxu0 0.0
        %286 = vmatprep.subr.mxu0 0.0
        %287 = vmatpush2.msra.mxu0 0.0
        %288 = vmatprep.subr.mxu0 0.0
        %289 = vmatpush2.msra.mxu0 0.0
        %290 = vmatprep.subr.mxu0 0.0
        %291 = vmatpush2.msra.mxu0 0.0
        %292 = vmatprep.subr.mxu0 0.0
        %293 = vmatpush2.msra.mxu0 0.0
        %294 = vmatprep.subr.mxu0 0.0
        %295 = vmatpush2.msra.mxu0 0.0
        %296 = vmatprep.subr.mxu0 0.0
        %297 = vmatpush2.msra.mxu0 0.0
        %298 = vmatprep.subr.mxu0 0.0
        %299 = vmatpush2.msra.mxu0 0.0
        %300 = vmatprep.subr.mxu0 0.0
        %301 = vmatpush2.msra.mxu0 0.0
        %302 = vmatprep.subr.mxu0 0.0
        %303 = vmatpush2.msra.mxu0 0.0
        %304 = vmatprep.subr.mxu0 0.0
        %305 = vmatpush2.msra.mxu0 0.0
        %306 = vmatprep.subr.mxu0 0.0
        %307 = vmatpush2.msra.mxu0 0.0
        %308 = vmatprep.subr.mxu0 0.0
        %309 = vmatpush2.msra.mxu0 0.0
        %310 = vmatprep.subr.mxu0 0.0
        %311 = vmatpush2.msra.mxu0 0.0
        %312 = vmatprep.subr.mxu0 0.0
        %313 = vmatpush2.msra.mxu0 0.0
        %314 = vmatprep.subr.mxu0 0.0
        %315 = vmatpush2.msra.mxu0 0.0
        %316 = vmatprep.mubr.f32.mxu0 0.0
        %317 = vmatmul.mubr.f32.gmra.mxu0 %v250
        %v318 = vpop.f32.mrf.mxu0
        %v319 = vadd.f32 0.0, %v318
        %v320 = vpop.f32.mrf.mxu0
        %321 = vdwg.mxu0
        %v322 = vadd.f32 %v247, %v319
        %v323 = vxor.u32 %v322, 2147483648
        %v324 = vmul.f32 %v323, 1.442695
        %v325 = vpow.pop %v324
        %v326 = vadd.f32 %v325, 1.0
        %v327 = vrcp.pop %v326
        %v328 = vmul.f32 1.0, %v327
        %v329 = vtanh.pop %v322
        %331 = vrot.lane.b32.xlu0 %v246, 32
        %v332 = vpop.permute.xlu0 %331
        %v334 = vmul.f32 %v328, %v332
        %336 = vrot.lane.b32.xlu0 %v329, 32
        %v337 = vpop.permute.xlu0 %336
        %v339 = vmul.f32 %v328, %v337
        %341 = vrot.lane.b32.xlu0 %v339, 32
        %v342 = vpop.permute.xlu0 %341
        %v344 = vadd.f32 %v334, %v342
        %v345 = vtanh.pop %v344
        %347 = vrot.lane.b32.xlu0 %v345, 32
        %v348 = vpop.permute.xlu0 %347
        %v350 = vmul.f32 %v328, %v348
        %s351 = scalar_lea.vmem %s205, 8 [#allocation5]
        %v352 = vld [vmem:[%s351] sm:$0xff]
        %354 = vrot.lane.b32.xlu0 %v350, 64
        %v355 = vpop.permute.xlu0 %354
        %v356 = vsel %vm248, %v355, 0
        %358 = vmatprep.subr.mxu0 0.0
        %359 = vmatpush1.msra.mxu0 0.0
        %360 = vmatprep.subr.mxu0 0.0
        %361 = vmatpush1.msra.mxu0 0.0
        %362 = vmatprep.subr.mxu0 0.0
        %363 = vmatpush1.msra.mxu0 0.0
        %364 = vmatprep.subr.mxu0 0.0
        %365 = vmatpush1.msra.mxu0 0.0
        %366 = vmatprep.subr.mxu0 0.0
        %367 = vmatpush1.msra.mxu0 0.0
        %368 = vmatprep.subr.mxu0 0.0
        %369 = vmatpush1.msra.mxu0 0.0
        %370 = vmatprep.subr.mxu0 0.0
        %371 = vmatpush1.msra.mxu0 0.0
        %372 = vmatprep.subr.mxu0 0.0
        %373 = vmatpush1.msra.mxu0 0.0
        %374 = vmatprep.subr.mxu0 0.0
        %375 = vmatpush1.msra.mxu0 0.0
        %376 = vmatprep.subr.mxu0 0.0
        %377 = vmatpush1.msra.mxu0 0.0
        %378 = vmatprep.subr.mxu0 0.0
        %379 = vmatpush1.msra.mxu0 0.0
        %380 = vmatprep.subr.mxu0 0.0
        %381 = vmatpush1.msra.mxu0 0.0
        %382 = vmatprep.subr.mxu0 0.0
        %383 = vmatpush1.msra.mxu0 %v244
        %384 = vmatprep.subr.mxu0 0.0
        %385 = vmatpush1.msra.mxu0 %v243
        %386 = vmatprep.subr.mxu0 0.0
        %387 = vmatpush1.msra.mxu0 %v242
        %388 = vmatprep.subr.mxu0 0.0
        %389 = vmatpush1.msra.mxu0 %v241
        %390 = vmatprep.subr.mxu0 0.0
        %391 = vmatpush2.msra.mxu0 0.0
        %392 = vmatprep.subr.mxu0 0.0
        %393 = vmatpush2.msra.mxu0 0.0
        %394 = vmatprep.subr.mxu0 0.0
        %395 = vmatpush2.msra.mxu0 0.0
        %396 = vmatprep.subr.mxu0 0.0
        %397 = vmatpush2.msra.mxu0 0.0
        %398 = vmatprep.subr.mxu0 0.0
        %399 = vmatpush2.msra.mxu0 0.0
        %400 = vmatprep.subr.mxu0 0.0
        %401 = vmatpush2.msra.mxu0 0.0
        %402 = vmatprep.subr.mxu0 0.0
        %403 = vmatpush2.msra.mxu0 0.0
        %404 = vmatprep.subr.mxu0 0.0
        %405 = vmatpush2.msra.mxu0 0.0
        %406 = vmatprep.subr.mxu0 0.0
        %407 = vmatpush2.msra.mxu0 0.0
        %408 = vmatprep.subr.mxu0 0.0
        %409 = vmatpush2.msra.mxu0 0.0
        %410 = vmatprep.subr.mxu0 0.0
        %411 = vmatpush2.msra.mxu0 0.0
        %412 = vmatprep.subr.mxu0 0.0
        %413 = vmatpush2.msra.mxu0 0.0
        %414 = vmatprep.subr.mxu0 0.0
        %415 = vmatpush2.msra.mxu0 0.0
        %416 = vmatprep.subr.mxu0 0.0
        %417 = vmatpush2.msra.mxu0 0.0
        %418 = vmatprep.subr.mxu0 0.0
        %419 = vmatpush2.msra.mxu0 0.0
        %420 = vmatprep.subr.mxu0 0.0
        %421 = vmatpush2.msra.mxu0 0.0
        %422 = vmatprep.mubr.f32.mxu0 0.0
        %423 = vmatmul.mubr.f32.gmra.mxu0 %v356
        %v424 = vpop.f32.mrf.mxu0
        %v425 = vadd.f32 0.0, %v424
        %v426 = vpop.f32.mrf.mxu0
        %427 = vdwg.mxu0
        %v428 = vadd.f32 %v352, %v425
        %v429 = vxor.u32 %v428, 2147483648
        %v430 = vmul.f32 %v429, 1.442695
        %v431 = vpow.pop %v430
        %v432 = vadd.f32 %v431, 1.0
        %v433 = vrcp.pop %v432
        %v434 = vmul.f32 1.0, %v433
        %v435 = vtanh.pop %v428
        %v436 = vmul.f32 %v434, %v344
        %438 = vrot.lane.b32.xlu0 %v435, 32
        %v439 = vpop.permute.xlu0 %438
        %v441 = vmul.f32 %v434, %v439
        %443 = vrot.lane.b32.xlu0 %v441, 32
        %v444 = vpop.permute.xlu0 %443
        %v446 = vadd.f32 %v436, %v444
        %v447 = vtanh.pop %v446
        %449 = vrot.lane.b32.xlu0 %v447, 32
        %v450 = vpop.permute.xlu0 %449
        %v452 = vmul.f32 %v434, %v450
        %s453 = scalar_lea.vmem %s205, 16 [#allocation5]
        %v454 = vld [vmem:[%s453] sm:$0xff]
        %456 = vrot.lane.b32.xlu0 %v452, 64
        %v457 = vpop.permute.xlu0 %456
        %v458 = vsel %vm248, %v457, 0
        %460 = vmatprep.subr.mxu0 0.0
        %461 = vmatpush1.msra.mxu0 0.0
        %462 = vmatprep.subr.mxu0 0.0
        %463 = vmatpush1.msra.mxu0 0.0
        %464 = vmatprep.subr.mxu0 0.0
        %465 = vmatpush1.msra.mxu0 0.0
        %466 = vmatprep.subr.mxu0 0.0
        %467 = vmatpush1.msra.mxu0 0.0
        %468 = vmatprep.subr.mxu0 0.0
        %469 = vmatpush1.msra.mxu0 0.0
        %470 = vmatprep.subr.mxu0 0.0
        %471 = vmatpush1.msra.mxu0 0.0
        %472 = vmatprep.subr.mxu0 0.0
        %473 = vmatpush1.msra.mxu0 0.0
        %474 = vmatprep.subr.mxu0 0.0
        %475 = vmatpush1.msra.mxu0 0.0
        %476 = vmatprep.subr.mxu0 0.0
        %477 = vmatpush1.msra.mxu0 0.0
        %478 = vmatprep.subr.mxu0 0.0
        %479 = vmatpush1.msra.mxu0 0.0
        %480 = vmatprep.subr.mxu0 0.0
        %481 = vmatpush1.msra.mxu0 0.0
        %482 = vmatprep.subr.mxu0 0.0
        %483 = vmatpush1.msra.mxu0 0.0
        %484 = vmatprep.subr.mxu0 0.0
        %485 = vmatpush1.msra.mxu0 %v244
        %486 = vmatprep.subr.mxu0 0.0
        %487 = vmatpush1.msra.mxu0 %v243
        %488 = vmatprep.subr.mxu0 0.0
        %489 = vmatpush1.msra.mxu0 %v242
        %490 = vmatprep.subr.mxu0 0.0
        %491 = vmatpush1.msra.mxu0 %v241
        %492 = vmatprep.subr.mxu0 0.0
        %493 = vmatpush2.msra.mxu0 0.0
        %494 = vmatprep.subr.mxu0 0.0
        %495 = vmatpush2.msra.mxu0 0.0
        %496 = vmatprep.subr.mxu0 0.0
        %497 = vmatpush2.msra.mxu0 0.0
        %498 = vmatprep.subr.mxu0 0.0
        %499 = vmatpush2.msra.mxu0 0.0
        %500 = vmatprep.subr.mxu0 0.0
        %501 = vmatpush2.msra.mxu0 0.0
        %502 = vmatprep.subr.mxu0 0.0
        %503 = vmatpush2.msra.mxu0 0.0
        %504 = vmatprep.subr.mxu0 0.0
        %505 = vmatpush2.msra.mxu0 0.0
        %506 = vmatprep.subr.mxu0 0.0
        %507 = vmatpush2.msra.mxu0 0.0
        %508 = vmatprep.subr.mxu0 0.0
        %509 = vmatpush2.msra.mxu0 0.0
        %510 = vmatprep.subr.mxu0 0.0
        %511 = vmatpush2.msra.mxu0 0.0
        %512 = vmatprep.subr.mxu0 0.0
        %513 = vmatpush2.msra.mxu0 0.0
        %514 = vmatprep.subr.mxu0 0.0
        %515 = vmatpush2.msra.mxu0 0.0
        %516 = vmatprep.subr.mxu0 0.0
        %517 = vmatpush2.msra.mxu0 0.0
        %518 = vmatprep.subr.mxu0 0.0
        %519 = vmatpush2.msra.mxu0 0.0
        %520 = vmatprep.subr.mxu0 0.0
        %521 = vmatpush2.msra.mxu0 0.0
        %522 = vmatprep.subr.mxu0 0.0
        %523 = vmatpush2.msra.mxu0 0.0
        %524 = vmatprep.mubr.f32.mxu0 0.0
        %525 = vmatmul.mubr.f32.gmra.mxu0 %v458
        %v526 = vpop.f32.mrf.mxu0
        %v527 = vadd.f32 0.0, %v526
        %v528 = vpop.f32.mrf.mxu0
        %529 = vdwg.mxu0
        %v530 = vadd.f32 %v454, %v527
        %v531 = vxor.u32 %v530, 2147483648
        %v532 = vmul.f32 %v531, 1.442695
        %v533 = vpow.pop %v532
        %v534 = vadd.f32 %v533, 1.0
        %v535 = vrcp.pop %v534
        %v536 = vmul.f32 1.0, %v535
        %v537 = vtanh.pop %v530
        %v538 = vmul.f32 %v536, %v446
        %540 = vrot.lane.b32.xlu0 %v537, 32
        %v541 = vpop.permute.xlu0 %540
        %v543 = vmul.f32 %v536, %v541
        %545 = vrot.lane.b32.xlu0 %v543, 32
        %v546 = vpop.permute.xlu0 %545
        %v548 = vadd.f32 %v538, %v546
        %v549 = vtanh.pop %v548
        %551 = vrot.lane.b32.xlu0 %v549, 32
        %v552 = vpop.permute.xlu0 %551
        %v554 = vmul.f32 %v536, %v552
        %s555 = scalar_lea.vmem %s205, 24 [#allocation5]
        %v556 = vld [vmem:[%s555] sm:$0xff]
        %558 = vrot.lane.b32.xlu0 %v554, 64
        %v559 = vpop.permute.xlu0 %558
        %v560 = vsel %vm248, %v559, 0
        %562 = vmatprep.subr.mxu0 0.0
        %563 = vmatpush1.msra.mxu0 0.0
        %564 = vmatprep.subr.mxu0 0.0
        %565 = vmatpush1.msra.mxu0 0.0
        %566 = vmatprep.subr.mxu0 0.0
        %567 = vmatpush1.msra.mxu0 0.0
        %568 = vmatprep.subr.mxu0 0.0
        %569 = vmatpush1.msra.mxu0 0.0
        %570 = vmatprep.subr.mxu0 0.0
        %571 = vmatpush1.msra.mxu0 0.0
        %572 = vmatprep.subr.mxu0 0.0
        %573 = vmatpush1.msra.mxu0 0.0
        %574 = vmatprep.subr.mxu0 0.0
        %575 = vmatpush1.msra.mxu0 0.0
        %576 = vmatprep.subr.mxu0 0.0
        %577 = vmatpush1.msra.mxu0 0.0
        %578 = vmatprep.subr.mxu0 0.0
        %579 = vmatpush1.msra.mxu0 0.0
        %580 = vmatprep.subr.mxu0 0.0
        %581 = vmatpush1.msra.mxu0 0.0
        %582 = vmatprep.subr.mxu0 0.0
        %583 = vmatpush1.msra.mxu0 0.0
        %584 = vmatprep.subr.mxu0 0.0
        %585 = vmatpush1.msra.mxu0 0.0
        %586 = vmatprep.subr.mxu0 0.0
        %587 = vmatpush1.msra.mxu0 %v244
        %588 = vmatprep.subr.mxu0 0.0
        %589 = vmatpush1.msra.mxu0 %v243
        %590 = vmatprep.subr.mxu0 0.0
        %591 = vmatpush1.msra.mxu0 %v242
        %592 = vmatprep.subr.mxu0 0.0
        %593 = vmatpush1.msra.mxu0 %v241
        %594 = vmatprep.subr.mxu0 0.0
        %595 = vmatpush2.msra.mxu0 0.0
        %596 = vmatprep.subr.mxu0 0.0
        %597 = vmatpush2.msra.mxu0 0.0
        %598 = vmatprep.subr.mxu0 0.0
        %599 = vmatpush2.msra.mxu0 0.0
        %600 = vmatprep.subr.mxu0 0.0
        %601 = vmatpush2.msra.mxu0 0.0
        %602 = vmatprep.subr.mxu0 0.0
        %603 = vmatpush2.msra.mxu0 0.0
        %604 = vmatprep.subr.mxu0 0.0
        %605 = vmatpush2.msra.mxu0 0.0
        %606 = vmatprep.subr.mxu0 0.0
        %607 = vmatpush2.msra.mxu0 0.0
        %608 = vmatprep.subr.mxu0 0.0
        %609 = vmatpush2.msra.mxu0 0.0
        %610 = vmatprep.subr.mxu0 0.0
        %611 = vmatpush2.msra.mxu0 0.0
        %612 = vmatprep.subr.mxu0 0.0
        %613 = vmatpush2.msra.mxu0 0.0
        %614 = vmatprep.subr.mxu0 0.0
        %615 = vmatpush2.msra.mxu0 0.0
        %616 = vmatprep.subr.mxu0 0.0
        %617 = vmatpush2.msra.mxu0 0.0
        %618 = vmatprep.subr.mxu0 0.0
        %619 = vmatpush2.msra.mxu0 0.0
        %620 = vmatprep.subr.mxu0 0.0
        %621 = vmatpush2.msra.mxu0 0.0
        %622 = vmatprep.subr.mxu0 0.0
        %623 = vmatpush2.msra.mxu0 0.0
        %624 = vmatprep.subr.mxu0 0.0
        %625 = vmatpush2.msra.mxu0 0.0
        %626 = vmatprep.mubr.f32.mxu0 0.0
        %627 = vmatmul.mubr.f32.gmra.mxu0 %v560
        %v628 = vpop.f32.mrf.mxu0
        %v629 = vadd.f32 0.0, %v628
        %v630 = vpop.f32.mrf.mxu0
        %631 = vdwg.mxu0
        %v632 = vadd.f32 %v556, %v629
        %v633 = vxor.u32 %v632, 2147483648
        %v634 = vmul.f32 %v633, 1.442695
        %v635 = vpow.pop %v634
        %v636 = vadd.f32 %v635, 1.0
        %v637 = vrcp.pop %v636
        %v638 = vmul.f32 1.0, %v637
        %v639 = vtanh.pop %v632
        %v640 = vmul.f32 %v638, %v548
        %642 = vrot.lane.b32.xlu0 %v639, 32
        %v643 = vpop.permute.xlu0 %642
        %v645 = vmul.f32 %v638, %v643
        %647 = vrot.lane.b32.xlu0 %v645, 32
        %v648 = vpop.permute.xlu0 %647
        %v650 = vadd.f32 %v640, %v648
        %v651 = vtanh.pop %v650
        %653 = vrot.lane.b32.xlu0 %v651, 32
        %v654 = vpop.permute.xlu0 %653
        %v656 = vmul.f32 %v638, %v654
        %658 = vrot.lane.b32.xlu0 %v656, 64
        %v659 = vpop.permute.xlu0 %658
        %661 = vst.msk [vmem:[#allocation2] sm:$0xff] %vm248, %v659
        %663 = vrot.lane.b32.xlu0 %v650, 96
        %v664 = vpop.permute.xlu0 %663
        %666 = vst.msk [vmem:[#allocation3] sm:$0xff] %vm248, %v664
        %p667 = scmp.eq.s32.totalorder %s25, 1
        // Predicated region
        $region45: #{tpu_custom_call.1} parent=35 // pred_check
          %p668 = pneg %p667
        $region46: #{tpu_custom_call.1} parent=35 // pred_check_branch
          %670 = sbr.rel (%p668) target = $region48
        $region47: #{tpu_custom_call.1} parent=35 // pred_region
          %v671 = vld [vmem:[%s2] sm:$0xff]
          %v672 = vld [vmem:[%s2 + $0x8] sm:$0xff]
          %v673 = vld [vmem:[%s2 + $0x10] sm:$0xff]
          %v674 = vld [vmem:[%s2 + $0x18] sm:$0xff]
          %v675 = vld [vmem:[#allocation4] sm:$0x1]
          %v677 = vlaneseq
          %v678 = vshrl.u32 %v677, 7
          %v679 = vsub.s32 0, %v678
          %v680 = vrot.slane %v675, %v679
          %v682 = vsel %vm248, %v659, 0
          %684 = vmatprep.subr.mxu0 0.0
          %685 = vmatpush1.msra.mxu0 0.0
          %686 = vmatprep.subr.mxu0 0.0
          %687 = vmatpush1.msra.mxu0 0.0
          %688 = vmatprep.subr.mxu0 0.0
          %689 = vmatpush1.msra.mxu0 0.0
          %690 = vmatprep.subr.mxu0 0.0
          %691 = vmatpush1.msra.mxu0 0.0
          %692 = vmatprep.subr.mxu0 0.0
          %693 = vmatpush1.msra.mxu0 0.0
          %694 = vmatprep.subr.mxu0 0.0
          %695 = vmatpush1.msra.mxu0 0.0
          %696 = vmatprep.subr.mxu0 0.0
          %697 = vmatpush1.msra.mxu0 0.0
          %698 = vmatprep.subr.mxu0 0.0
          %699 = vmatpush1.msra.mxu0 0.0
          %700 = vmatprep.subr.mxu0 0.0
          %701 = vmatpush1.msra.mxu0 0.0
          %702 = vmatprep.subr.mxu0 0.0
          %703 = vmatpush1.msra.mxu0 0.0
          %704 = vmatprep.subr.mxu0 0.0
          %705 = vmatpush1.msra.mxu0 0.0
          %706 = vmatprep.subr.mxu0 0.0
          %707 = vmatpush1.msra.mxu0 0.0
          %708 = vmatprep.subr.mxu0 0.0
          %709 = vmatpush1.msra.mxu0 %v674
          %710 = vmatprep.subr.mxu0 0.0
          %711 = vmatpush1.msra.mxu0 %v673
          %712 = vmatprep.subr.mxu0 0.0
          %713 = vmatpush1.msra.mxu0 %v672
          %714 = vmatprep.subr.mxu0 0.0
          %715 = vmatpush1.msra.mxu0 %v671
          %716 = vmatprep.subr.mxu0 0.0
          %717 = vmatpush2.msra.mxu0 0.0
          %718 = vmatprep.subr.mxu0 0.0
          %719 = vmatpush2.msra.mxu0 0.0
          %720 = vmatprep.subr.mxu0 0.0
          %721 = vmatpush2.msra.mxu0 0.0
          %722 = vmatprep.subr.mxu0 0.0
          %723 = vmatpush2.msra.mxu0 0.0
          %724 = vmatprep.subr.mxu0 0.0
          %725 = vmatpush2.msra.mxu0 0.0
          %726 = vmatprep.subr.mxu0 0.0
          %727 = vmatpush2.msra.mxu0 0.0
          %728 = vmatprep.subr.mxu0 0.0
          %729 = vmatpush2.msra.mxu0 0.0
          %730 = vmatprep.subr.mxu0 0.0
          %731 = vmatpush2.msra.mxu0 0.0
          %732 = vmatprep.subr.mxu0 0.0
          %733 = vmatpush2.msra.mxu0 0.0
          %734 = vmatprep.subr.mxu0 0.0
          %735 = vmatpush2.msra.mxu0 0.0
          %736 = vmatprep.subr.mxu0 0.0
          %737 = vmatpush2.msra.mxu0 0.0
          %738 = vmatprep.subr.mxu0 0.0
          %739 = vmatpush2.msra.mxu0 0.0
          %740 = vmatprep.subr.mxu0 0.0
          %741 = vmatpush2.msra.mxu0 0.0
          %742 = vmatprep.subr.mxu0 0.0
          %743 = vmatpush2.msra.mxu0 0.0
          %744 = vmatprep.subr.mxu0 0.0
          %745 = vmatpush2.msra.mxu0 0.0
          %746 = vmatprep.subr.mxu0 0.0
          %747 = vmatpush2.msra.mxu0 0.0
          %748 = vmatprep.mubr.f32.mxu0 0.0
          %749 = vmatmul.mubr.f32.gmra.mxu0 %v682
          %v750 = vpop.f32.mrf.mxu0
          %v751 = vadd.f32 %v680, %v750
          %v752 = vpop.f32.mrf.mxu0
          %753 = vdwg.mxu0
          %vm754 = vcmask 7168
          %755 = vst.msk [vmem:[%s233] sm:$0xff] %vm754, %v751
        $region48: #{tpu_custom_call.1} parent=35 // pred_fallthru
          _
        %p756 = scmp.lt.s32.totalorder %s24, 0
        %s757 = scalar_select %p756, %s24, 0
        %s758 = smul.addr %s757, 8
        %s759 = scalar_lea.vmem %s4, %s758
        // Predicated region
        $region49: #{tpu_custom_call.1} parent=35 // pred_check
          %p760 = pneg %p141
        $region50: #{tpu_custom_call.1} parent=35 // pred_check_branch
          %762 = sbr.rel (%p760) target = $region52
        $region51: #{tpu_custom_call.1} parent=35 // pred_region
          _
        $region52: #{tpu_custom_call.1} parent=35 // pred_fallthru
          _
        // Predicated region
        $region53: #{tpu_custom_call.1} parent=35 // pred_check
          %p763 = pneg %p141
        $region54: #{tpu_custom_call.1} parent=35 // pred_check_branch
          %765 = sbr.rel (%p763) target = $region56
        $region55: #{tpu_custom_call.1} parent=35 // pred_region
          %p766 = scmp.lt.s32.totalorder %s24, 0
          %s767 = scalar_select %p766, %s24, 0
          %s768 = smul.addr %s767, 8
          %s769 = scalar_lea.vmem %s4, %s768
        $region56: #{tpu_custom_call.1} parent=35 // pred_fallthru
          _
      $region36: #{tpu_custom_call.1} parent=5 // pred_fallthru
        _
      %p770 = scmp.le.s32.totalorder 2, %s15
      // Predicated region
      $region57: #{tpu_custom_call.1} parent=5 // pred_check
        %p771 = pneg %p770
      $region58: #{tpu_custom_call.1} parent=5 // pred_check_branch
        %773 = sbr.rel (%p771) target = $region60
      $region59: #{tpu_custom_call.1} parent=5 // pred_region
        %s774 = ssub.s32 %s15, 2
      $region60: #{tpu_custom_call.1} parent=5 // pred_fallthru
        _
    $region6: #{tpu_custom_call.1} parent=1 // loop_footer
      %s19 = sadd.s32 1, %s15
    $region7: #{tpu_custom_call.1} parent=1 // loop_footer_branch
      %14 = sbr.rel target = $region3
    $region8: #{tpu_custom_call.1} parent=1 // loop_exit
      _
    %775 = vsyncpa [#allocation6], 1
    %s776 = scalar_lea.sflag [#allocation6], 1
    %777 = vsyncpa %s776, 1

</llo_original>
